<compile_context>
chip_gen: v7x
topology: tpu7x:2x2x1
jax: 0.10.0
libtpu: 0.0.40
codegen_flags: <defaults>
</compile_context>

<pallas_src>
import functools

import jax
import jax.numpy as jnp
from jax.experimental import pallas as pl
from jax.experimental.pallas import tpu as pltpu


# --------------------------------------------------------------------------
# Kernels
# --------------------------------------------------------------------------
def _mean_pool_simple_kernel(x_ref, o_ref, *, inv_n):
    """Whole token axis in one block: direct sum * 1/N, no scratch."""
    x = x_ref[...].astype(jnp.float32)            # (TB, N, D)
    o_ref[...] = (jnp.sum(x, axis=1) * inv_n).astype(o_ref.dtype)


def _mean_pool_tiled_kernel(x_ref, o_ref, acc_ref, *, n_tokens, tn):
    """Token axis tiled over grid axis 1 with an f32 accumulator.

    Tail handling is gated to the last token block only, via a static slice
    (N % tn is a Python int), so full blocks pay no mask/iota overhead.
    """
    k = pl.program_id(1)
    last = pl.num_programs(1) - 1
    rem = n_tokens % tn                            # Python int

    @pl.when(k == 0)
    def _():
        acc_ref[...] = jnp.zeros_like(acc_ref)

    if rem == 0:
        acc_ref[...] += jnp.sum(x_ref[...].astype(jnp.float32), axis=1)
    else:
        @pl.when(k != last)
        def _():
            acc_ref[...] += jnp.sum(x_ref[...].astype(jnp.float32), axis=1)

        @pl.when(k == last)
        def _():
            # static slice of the partial last block; padded rows never read
            acc_ref[...] += jnp.sum(x_ref[:, :rem, :].astype(jnp.float32), axis=1)

    @pl.when(k == last)
    def _():
        o_ref[...] = (acc_ref[...] * (1.0 / n_tokens)).astype(o_ref.dtype)


def _cls_pool_kernel(x_ref, o_ref):
    """CLS pooling: token dim is squeezed by the BlockSpec, so this is a copy."""
    o_ref[...] = x_ref[...]                        # (TB, D)


# --------------------------------------------------------------------------
# Helpers
# --------------------------------------------------------------------------
def _vmem_config():
    """(per-input-tile byte budget, vmem_limit_bytes), sized per TPU generation."""
    try:
        cap = pltpu.get_tpu_info().vmem_capacity_bytes
    except Exception:
        cap = 64 * 1024 * 1024                     # conservative (v7x-sized) fallback
    if cap >= 128 * 1024 * 1024:                   # v5e / v6e: 128 MiB physical VMEM
        return 14 * 1024 * 1024, 80 * 1024 * 1024
    # v7x: 64 MiB physical -> keep 2x double-buffered input + out + acc well under
    return 9 * 1024 * 1024, 44 * 1024 * 1024


def _choose_batch_tile(B):
    # sublane-dense (multiple of 8) when possible; otherwise the whole tiny batch
    if B < 8:
        return B
    tb = min((B // 8) * 8, 32)
    if B >= 16:
        # keep >=2 steps on the 'parallel' batch axis so v7x megacore can shard
        tb = min(tb, max(8, (B // 2) // 8 * 8))
    return tb


def _maybe_buffered_spec(block_shape, index_map, n_buffers):
    """BlockSpec with optional N-deep pipelining; falls back if unsupported."""
    if n_buffers is None:
        return pl.BlockSpec(block_shape, index_map)
    try:
        return pl.BlockSpec(block_shape, index_map,
                            pipeline_mode=pl.Buffered(n_buffers))
    except Exception:                              # older jax w/o pipeline_mode
        return pl.BlockSpec(block_shape, index_map)


# --------------------------------------------------------------------------
# Wrapper
# --------------------------------------------------------------------------
def pool_last_layer(x, pool="cls", *, token_tile=None):
    """Pallas implementation of PoolLastLayer.forward. x: (B, N, D) -> (B, D)."""
    B, N, D = x.shape
    itemsize = jnp.dtype(x.dtype).itemsize
    tile_budget, vmem_limit = _vmem_config()
    out_shape = jax.ShapeDtypeStruct((B, D), x.dtype)

    if pool == "mean":
        tb = _choose_batch_tile(B)
        if token_tile is not None:
            tn = min(max(8, (token_tile // 8) * 8), N)
        else:
            # Prefer shrinking tb over tiling tokens: a full-N tile is one
            # contiguous HBM slab (single full-BW DMA, no reduction axis).
            while tb > 8 and tb * N * D * itemsize > tile_budget:
                tb = max(8, (tb // 2) // 8 * 8)
            if tb * N * D * itemsize <= tile_budget:
                tn = N
            else:
                tn = max(8, (tile_budget // (tb * D * itemsize)) // 8 * 8)
                tn = min(tn, N)
        grid_b = pl.cdiv(B, tb)
        grid_n = pl.cdiv(N, tn)
        cost = pl.CostEstimate(
            flops=B * N * D,
            transcendentals=0,
            bytes_accessed=B * N * D * itemsize + B * D * itemsize,
        )

        if grid_n == 1:
            # Common ViT case: whole token axis fits -> no accumulator/scratch.
            kernel = functools.partial(_mean_pool_simple_kernel, inv_n=1.0 / N)
            grid_spec = pltpu.PrefetchScalarGridSpec(
                num_scalar_prefetch=0,
                grid=(grid_b,),
                in_specs=[pl.BlockSpec((tb, tn, D), lambda b: (b, 0, 0))],
                out_specs=pl.BlockSpec((tb, D), lambda b: (b, 0)),
            )
            dim_sem = ("parallel",)
        else:
            n_buf = 3 if tb * tn * D * itemsize < 2 * 1024 * 1024 else None
            kernel = functools.partial(_mean_pool_tiled_kernel, n_tokens=N, tn=tn)
            grid_spec = pltpu.PrefetchScalarGridSpec(
                num_scalar_prefetch=0,
                grid=(grid_b, grid_n),             # reduction (token) axis last
                in_specs=[_maybe_buffered_spec((tb, tn, D),
                                               lambda b, k: (b, k, 0), n_buf)],
                out_specs=pl.BlockSpec((tb, D), lambda b, k: (b, 0)),
                scratch_shapes=[pltpu.VMEM((tb, D), jnp.float32)],
            )
            dim_sem = ("parallel", "arbitrary")
    else:
        # CLS pooling: squeezed token dim -> only token 0 of each row is DMA'd.
        tb = _choose_batch_tile(B)
        grid_b = pl.cdiv(B, tb)
        kernel = _cls_pool_kernel
        grid_spec = pltpu.PrefetchScalarGridSpec(
            num_scalar_prefetch=0,
            grid=(grid_b,),
            in_specs=[pl.BlockSpec((tb, None, D), lambda b: (b, 0, 0))],
            out_specs=pl.BlockSpec((tb, D), lambda b: (b, 0)),
        )
        dim_sem = ("parallel",)
        cost = pl.CostEstimate(
            flops=0,
            transcendentals=0,
            bytes_accessed=2 * B * D * itemsize,
        )

    return pl.pallas_call(
        kernel,
        out_shape=out_shape,
        grid_spec=grid_spec,
        compiler_params=pltpu.CompilerParams(
            dimension_semantics=dim_sem,
            vmem_limit_bytes=vmem_limit,
        ),
        cost_estimate=cost,
    )(x)


# --------------------------------------------------------------------------
# Test
# --------------------------------------------------------------------------
if __name__ == "__main__":
    # case 1: tiny ViT-like input, f32 -> simple (no-scratch) mean path + CLS
    B, N, D = 2, 8, 32
    x = jax.random.normal(jax.random.PRNGKey(0), (B, N, D), dtype=jnp.float32)
    out_mean = jax.block_until_ready(pool_last_layer(x, pool="mean"))
    out_cls = jax.block_until_ready(pool_last_layer(x, pool="cls"))
    assert out_mean.shape == (B, D) and out_cls.shape == (B, D)
    assert jnp.allclose(out_mean, jnp.mean(x, axis=1), atol=1e-5, rtol=1e-5)
    assert jnp.allclose(out_cls, x[:, 0], atol=1e-6, rtol=1e-6)

    # case 2: bf16, N not multiple of 8, user token_tile -> tiled accumulator
    # path with static-slice tail block (and 3-deep buffering on small tiles).
    B2, N2, D2 = 8, 197, 128
    x2 = jax.random.normal(jax.random.PRNGKey(1), (B2, N2, D2), dtype=jnp.bfloat16)
    out_mean2 = jax.block_until_ready(pool_last_layer(x2, pool="mean", token_tile=64))
    out_cls2 = jax.block_until_ready(pool_last_layer(x2, pool="cls"))
    ref_mean2 = jnp.mean(x2.astype(jnp.float32), axis=1)
    assert out_mean2.shape == (B2, D2) and out_cls2.shape == (B2, D2)
    assert jnp.allclose(out_mean2.astype(jnp.float32), ref_mean2,
                        atol=2e-2, rtol=2e-2)
    assert jnp.allclose(out_cls2, x2[:, 0])

    # case 3: B >= 16 -> batch tile capped so the parallel axis has >=2 steps
    B3, N3, D3 = 16, 12, 128
    x3 = jax.random.normal(jax.random.PRNGKey(2), (B3, N3, D3), dtype=jnp.float32)
    out_mean3 = jax.block_until_ready(pool_last_layer(x3, pool="mean"))
    out_cls3 = jax.block_until_ready(pool_last_layer(x3, pool="cls"))
    assert jnp.allclose(out_mean3, jnp.mean(x3, axis=1), atol=1e-5, rtol=1e-5)
    assert jnp.allclose(out_cls3, x3[:, 0])

    print("KERNEL_OK")
</pallas_src>

<mosaic_0001>
module attributes {stable_mosaic.version = 11 : i64} {
  func.func @_mean_pool_simple_kernel(%arg0: i32, %arg1: memref<2x8x32xf32, #tpu.memory_space<vmem>>, %arg2: memref<2x32xf32, #tpu.memory_space<vmem>>) attributes {dimension_semantics = [#tpu.dimension_semantics<parallel>], iteration_bounds = array<i64: 1>, scalar_prefetch = 0 : i64, scratch_operands = 0 : i64, tpu.core_type = #tpu.core_type<tc>, window_params = [{transform_indices = @transform_0, window_bounds = array<i64: 2, 8, 32>}, {transform_indices = @transform_1, window_bounds = array<i64: 2, 32>}]} {
    %c0 = arith.constant 0 : index
    %c0_0 = arith.constant 0 : index
    %c0_1 = arith.constant 0 : index
    %0 = vector.load %arg1[%c0, %c0_0, %c0_1] : memref<2x8x32xf32, #tpu.memory_space<vmem>>, vector<2x8x32xf32>
    %cst = arith.constant dense<0.000000e+00> : vector<2x32xf32>
    %1 = vector.multi_reduction <add>, %0, %cst [1] : vector<2x8x32xf32> to vector<2x32xf32>
    %cst_2 = arith.constant 1.250000e-01 : f32
    %2 = vector.broadcast %cst_2 : f32 to vector<2x32xf32>
    %3 = arith.mulf %1, %2 : vector<2x32xf32>
    %c0_3 = arith.constant 0 : index
    %c0_4 = arith.constant 0 : index
    %4 = vector.load %arg2[%c0_3, %c0_4] : memref<2x32xf32, #tpu.memory_space<vmem>>, vector<2x32xf32>
    tpu.vector_store %arg2[%c0_3, %c0_4], %3 {strides = array<i32>} : memref<2x32xf32, #tpu.memory_space<vmem>>, vector<2x32xf32>,
    return
  }
  func.func @transform_0(%arg0: i32) -> (i32, i32, i32) {
    %c0_i32 = arith.constant 0 : i32
    %c0_i32_0 = arith.constant 0 : i32
    %c0_i32_1 = arith.constant 0 : i32
    return %arg0, %c0_i32, %c0_i32_0 : i32, i32, i32
  }
  func.func @transform_1(%arg0: i32) -> (i32, i32) {
    %c0_i32 = arith.constant 0 : i32
    %c0_i32_0 = arith.constant 0 : i32
    return %arg0, %c0_i32 : i32, i32
  }
}

</mosaic_0001>

<llo_original>
// kernel: tpu_custom_call.1
$region0: #{tpu_custom_call.1}
  #allocation0 [shape = 'u32[]', space=smem, size = 0x4, offset = 0x4, fixed_abs, tag = 'smem constant byte address 0x4 - core index']
  #allocation1 [shape = 'u32[144,128]{1,0:T(1,128)}', space=vmem, size = 0x12000, scoped, tag = 'internal scratch']
  %s0 = inlined_call_operand.hbm [shape: f32[2,8,32], index: 0, kind: input, shape index: {}]
  %s1 = inlined_call_operand.hbm [shape: f32[2,32], index: 1, kind: output, shape index: {}]
  %s2 = sld [smem:[#allocation0]]
  $region18: #{tpu_custom_call.1} parent=0
    _
  %s4 = ssub.s32 1, %s2
  %s5 = scalar_select 0, %s4, %s2
  $region1: #{tpu_custom_call.1} parent=0
    #allocation2 [shape = 'u8[8192]{0}', space=vmem, size = 0x2000, scoped, tag = 'input window, operand 0, single buffered']
    #allocation3 [shape = 's32[1]{0}', space=sflag, size = 0x4, scoped, tag = 'scoped memory for tpu_custom_call.1']
    #allocation4 [shape = 's32[1]{0}', space=sflag, size = 0x4, scoped, tag = 'scoped memory for tpu_custom_call.1']
    #allocation5 [shape = 'u8[1024]{0}', space=vmem, size = 0x400, scoped, tag = 'output window, operand 0, single buffered']
    %6 = vsyncpa [#allocation3], 0
    %7 = vsyncpa [#allocation4], 0
    // Predicated region
    $region2: #{tpu_custom_call.1} parent=1 // pred_check
      _
    $region3: #{tpu_custom_call.1} parent=1 // pred_check_branch
      %9 = sbr.rel (0) target = $region5
    $region4: #{tpu_custom_call.1} parent=1 // pred_region
      %s11 = ssub.s32 256, 256
      %12 = vsyncadd [#allocation3], %s11
      %s13 = sshll.u32 [#allocation2], 4
      %s14 = int_to_ptr.vmem [resolvable:$true] %s13
      %19 = dma.hbm_to_vmem [thread:$0]  %s0, 256, %s14, [#allocation3], 128, 128, 8
    $region5: #{tpu_custom_call.1} parent=1 // pred_fallthru
      _
    // Predicated region
    $region6: #{tpu_custom_call.1} parent=1 // pred_check
      _
    $region7: #{tpu_custom_call.1} parent=1 // pred_check_branch
      %21 = sbr.rel (0) target = $region9
    $region8: #{tpu_custom_call.1} parent=1 // pred_region
      %22 = dma.done [#allocation3], 256
    $region9: #{tpu_custom_call.1} parent=1 // pred_fallthru
      _
    %v23 = vld [vmem:[#allocation2] sm:$0xff]
    %v24 = vld [vmem:[#allocation2 + $0x8] sm:$0xff]
    %vm25 = vcmask 261120
    %v26 = vsel %vm25, %v23, 0.0
    %v27 = vrot.slane %v26, 4
    %v28 = vadd.f32 %v26, %v27
    %v29 = vrot.slane %v28, 2
    %v30 = vadd.f32 %v28, %v29
    %v31 = vrot.slane %v30, 1
    %v32 = vadd.f32 %v30, %v31
    %v33 = vsel %vm25, %v24, 0.0
    %v34 = vrot.slane %v33, 4
    %v35 = vadd.f32 %v33, %v34
    %v36 = vrot.slane %v35, 2
    %v37 = vadd.f32 %v35, %v36
    %v38 = vrot.slane %v37, 1
    %v39 = vadd.f32 %v37, %v38
    %v40 = vmul.f32 %v32, 0.125
    %v41 = vmul.f32 %v39, 0.125
    %vm44 = vcmask 1041409
    %v45 = vsel %vm44, %v41, %v40
    %vm47 = vcmask 254976
    %48 = vst.msk [vmem:[#allocation5] sm:$0x3] %vm47, %v45
    // Predicated region
    $region10: #{tpu_custom_call.1} parent=1 // pred_check
      _
    $region11: #{tpu_custom_call.1} parent=1 // pred_check_branch
      %50 = sbr.rel (0) target = $region13
    $region12: #{tpu_custom_call.1} parent=1 // pred_region
      %s52 = ssub.s32 32, 32
      %53 = vsyncadd [#allocation4], %s52
      %s55 = sshll.u32 [#allocation5], 4
      %s56 = int_to_ptr.vmem [resolvable:$true] %s55
      %58 = dma.vmem_to_hbm [thread:$0]  %s56, 32, %s1, [#allocation4]
    $region13: #{tpu_custom_call.1} parent=1 // pred_fallthru
      _
    // Predicated region
    $region14: #{tpu_custom_call.1} parent=1 // pred_check
      _
    $region15: #{tpu_custom_call.1} parent=1 // pred_check_branch
      %60 = sbr.rel (0) target = $region17
    $region16: #{tpu_custom_call.1} parent=1 // pred_region
      %61 = dma.done [#allocation4], 32
    $region17: #{tpu_custom_call.1} parent=1 // pred_fallthru
      _
    %62 = vsyncpa [#allocation3], 1
    %63 = vsyncpa [#allocation4], 1

</llo_original>
